<compile_context>
chip_gen: v7x
topology: tpu7x:2x2x1
jax: 0.10.0
libtpu: 0.0.40
codegen_flags: <defaults>
</compile_context>

<pallas_src>
import jax
import jax.numpy as jnp
from jax.experimental import pallas as pl
from jax.experimental.pallas import tpu as pltpu

_LANE = 128
_VMEM = pl.BlockSpec(memory_space=pltpu.MemorySpace.VMEM)


def _round_up(n, m):
    return (n + m - 1) // m * m


# ---------------------------------------------------------------------------
# Fused kernel: num_layers tanh-RNN layers + Linear head + LogSoftmax over the
# sequence axis (PyTorch dim=1 with batch_first=True, batch=1).
# ---------------------------------------------------------------------------
def fused_rnn_kernel(x_ref, h0_ref, wih_ref, whh_ref, b_ref,
                     wlin_ref, blin_ref, out_ref, hT_ref):
    num_layers = wih_ref.shape[0]
    seq_len = x_ref.shape[0]

    layer_in = x_ref[...]                                        # (seq, P)
    for layer in range(num_layers):                              # static, small
        wih = wih_ref[layer]                                     # (P, P)
        whh = whh_ref[layer]                                     # (P, P)
        b = b_ref[layer]                                         # (1, P)

        # Batched input projection for all timesteps at once (single MXU pass).
        xproj = jnp.dot(layer_in, wih,
                        preferred_element_type=jnp.float32) + b  # (seq, P)

        # Fully unrolled recurrence; h stays in vregs across steps.
        h = h0_ref[layer]                                        # (1, P)
        rows = []
        for t in range(seq_len):
            pre = xproj[t:t + 1, :] + jnp.dot(
                h, whh, preferred_element_type=jnp.float32)
            h = jnp.tanh(pre)
            rows.append(h)
        layer_in = jnp.concatenate(rows, axis=0)                 # (seq, P)
        hT_ref[layer] = h                                        # final hidden

    # Linear head + LogSoftmax over the *sequence* axis (== PyTorch dim=1).
    y = jnp.dot(layer_in, wlin_ref[...],
                preferred_element_type=jnp.float32) + blin_ref[...]   # (seq, Pout)
    m = jnp.max(y, axis=0, keepdims=True)
    z = y - m
    lse = jnp.log(jnp.sum(jnp.exp(z), axis=0, keepdims=True))
    out_ref[...] = z - lse                                       # lane-dense store


# ---------------------------------------------------------------------------
# Module-equivalent wrapper
# ---------------------------------------------------------------------------
def init_params(key, input_size, hidden_size, output_size, num_layers=1):
    params = {"layers": []}
    k = 1.0 / jnp.sqrt(hidden_size)
    for layer in range(num_layers):
        in_sz = input_size if layer == 0 else hidden_size
        key, k1, k2, k3, k4 = jax.random.split(key, 5)
        wih_t = jax.random.uniform(k1, (in_sz, hidden_size), jnp.float32, -k, k)
        whh_t = jax.random.uniform(k2, (hidden_size, hidden_size), jnp.float32, -k, k)
        b_ih = jax.random.uniform(k3, (1, hidden_size), jnp.float32, -k, k)
        b_hh = jax.random.uniform(k4, (1, hidden_size), jnp.float32, -k, k)
        params["layers"].append((wih_t, whh_t, b_ih + b_hh))
    key, k5, k6 = jax.random.split(key, 3)
    params["wlin_t"] = jax.random.uniform(
        k5, (hidden_size, output_size), jnp.float32, -k, k)
    params["blin"] = jax.random.uniform(k6, (1, output_size), jnp.float32, -k, k)
    return params


def _pad_to(a, shape):
    return jnp.pad(a, [(0, t - s) for s, t in zip(a.shape, shape)])


@jax.jit
def rnn_forward(params, x, hidden):
    """x: (seq_len, input_size); hidden: (num_layers, 1, hidden_size).

    Returns (output (1, seq_len, output_size), hidden (num_layers, 1, hidden_size)),
    matching the PyTorch module (input.unsqueeze(0), batch_first=True, batch=1).
    """
    seq_len, input_size = x.shape
    num_layers = len(params["layers"])
    hidden_size = params["layers"][0][1].shape[0]
    output_size = params["wlin_t"].shape[1]

    # Common lane-dense padded widths.
    P = max(_round_up(input_size, _LANE), _round_up(hidden_size, _LANE))
    P_out = _round_up(output_size, _LANE)

    x_p = _pad_to(x, (seq_len, P))
    h0_p = _pad_to(hidden, (num_layers, 1, P))
    wih_p = jnp.stack([_pad_to(w, (P, P)) for (w, _, _) in params["layers"]])
    whh_p = jnp.stack([_pad_to(w, (P, P)) for (_, w, _) in params["layers"]])
    b_p = jnp.stack([_pad_to(b, (1, P)) for (_, _, b) in params["layers"]])
    wlin_p = _pad_to(params["wlin_t"], (P, P_out))
    blin_p = _pad_to(params["blin"], (1, P_out))

    out_p, hT_p = pl.pallas_call(
        fused_rnn_kernel,
        out_shape=(
            jax.ShapeDtypeStruct((seq_len, P_out), jnp.float32),
            jax.ShapeDtypeStruct((num_layers, 1, P), jnp.float32),
        ),
        in_specs=[_VMEM] * 7,
        out_specs=(_VMEM, _VMEM),
    )(x_p, h0_p, wih_p, whh_p, b_p, wlin_p, blin_p)

    output = out_p[None, :, :output_size]          # (1, seq, output_size)
    hidden_out = hT_p[:, :, :hidden_size]          # (num_layers, 1, hidden_size)
    return output, hidden_out


def _reference_forward(params, x, hidden):
    """Pure-JAX reference for a correctness sanity check."""
    layer_in = x
    new_hidden = []
    for layer, (wih_t, whh_t, b) in enumerate(params["layers"]):
        h = hidden[layer]
        outs = []
        for t in range(layer_in.shape[0]):
            h = jnp.tanh(layer_in[t:t + 1] @ wih_t + b + h @ whh_t)
            outs.append(h)
        layer_in = jnp.concatenate(outs, axis=0)
        new_hidden.append(h)
    y = layer_in @ params["wlin_t"] + params["blin"]
    y = y - jax.scipy.special.logsumexp(y, axis=0, keepdims=True)  # dim=1 == seq
    return y[None, :, :], jnp.stack(new_hidden, axis=0)


if __name__ == "__main__":
    input_size, hidden_size, output_size = 16, 32, 8
    seq_len = 8

    key = jax.random.PRNGKey(0)

    for num_layers in (1, 2):
        kp, kx = jax.random.split(jax.random.fold_in(key, num_layers))
        params = init_params(kp, input_size, hidden_size, output_size, num_layers)

        x = jax.random.normal(kx, (seq_len, input_size), jnp.float32)
        hidden0 = jnp.zeros((num_layers, 1, hidden_size), jnp.float32)  # initHidden()

        output, hidden_new = rnn_forward(params, x, hidden0)
        jax.block_until_ready((output, hidden_new))

        ref_out, ref_hid = _reference_forward(params, x, hidden0)
        assert output.shape == (1, seq_len, output_size)
        assert hidden_new.shape == (num_layers, 1, hidden_size)
        assert jnp.allclose(output, ref_out, atol=1e-5)
        assert jnp.allclose(hidden_new, ref_hid, atol=1e-5)

    print("KERNEL_OK")
</pallas_src>

<mosaic_0001>
module attributes {stable_mosaic.version = 11 : i64} {
  func.func @fused_rnn_kernel(%arg0: memref<8x128xf32, #tpu.memory_space<vmem>>, %arg1: memref<1x1x128xf32, #tpu.memory_space<vmem>>, %arg2: memref<1x128x128xf32, #tpu.memory_space<vmem>>, %arg3: memref<1x128x128xf32, #tpu.memory_space<vmem>>, %arg4: memref<1x1x128xf32, #tpu.memory_space<vmem>>, %arg5: memref<128x128xf32, #tpu.memory_space<vmem>>, %arg6: memref<1x128xf32, #tpu.memory_space<vmem>>, %arg7: memref<8x128xf32, #tpu.memory_space<vmem>>, %arg8: memref<1x1x128xf32, #tpu.memory_space<vmem>>) attributes {dimension_semantics = [], scalar_prefetch = 0 : i64, scratch_operands = 0 : i64, tpu.core_type = #tpu.core_type<tc>} {
    %c0 = arith.constant 0 : index
    %c0_0 = arith.constant 0 : index
    %0 = vector.load %arg0[%c0, %c0_0] : memref<8x128xf32, #tpu.memory_space<vmem>>, vector<8x128xf32>
    %c0_1 = arith.constant 0 : index
    %c0_2 = arith.constant 0 : index
    %c0_3 = arith.constant 0 : index
    %1 = vector.load %arg2[%c0_1, %c0_2, %c0_3] : memref<1x128x128xf32, #tpu.memory_space<vmem>>, vector<1x128x128xf32>
    %2 = vector.shape_cast %1 : vector<1x128x128xf32> to vector<128x128xf32>
    %c0_4 = arith.constant 0 : index
    %c0_5 = arith.constant 0 : index
    %c0_6 = arith.constant 0 : index
    %3 = vector.load %arg3[%c0_4, %c0_5, %c0_6] : memref<1x128x128xf32, #tpu.memory_space<vmem>>, vector<1x128x128xf32>
    %4 = vector.shape_cast %3 : vector<1x128x128xf32> to vector<128x128xf32>
    %c0_7 = arith.constant 0 : index
    %c0_8 = arith.constant 0 : index
    %c0_9 = arith.constant 0 : index
    %5 = vector.load %arg4[%c0_7, %c0_8, %c0_9] : memref<1x1x128xf32, #tpu.memory_space<vmem>>, vector<1x1x128xf32>
    %6 = vector.shape_cast %5 : vector<1x1x128xf32> to vector<1x128xf32>
    %cst = arith.constant dense<0.000000e+00> : vector<8x128xf32>
    %7 = tpu.matmul %0, %2, %cst {dimension_numbers = #tpu.dot_dimension_numbers<[1], [0], [0], [1], [0, 0, 1, 1], [], []>} : vector<8x128xf32>, vector<128x128xf32>, vector<8x128xf32> -> vector<8x128xf32>
    %8 = vector.broadcast %6 : vector<1x128xf32> to vector<8x128xf32>
    %9 = arith.addf %7, %8 : vector<8x128xf32>
    %c0_10 = arith.constant 0 : index
    %c0_11 = arith.constant 0 : index
    %c0_12 = arith.constant 0 : index
    %10 = vector.load %arg1[%c0_10, %c0_11, %c0_12] : memref<1x1x128xf32, #tpu.memory_space<vmem>>, vector<1x1x128xf32>
    %11 = vector.shape_cast %10 : vector<1x1x128xf32> to vector<1x128xf32>
    %12 = vector.extract_strided_slice %9 {offsets = [0, 0], sizes = [1, 128], strides = [1, 1]} : vector<8x128xf32> to vector<1x128xf32>
    %cst_13 = arith.constant dense<0.000000e+00> : vector<1x128xf32>
    %13 = tpu.matmul %11, %4, %cst_13 {dimension_numbers = #tpu.dot_dimension_numbers<[1], [0], [0], [1], [0, 0, 1, 1], [], []>} : vector<1x128xf32>, vector<128x128xf32>, vector<1x128xf32> -> vector<1x128xf32>
    %14 = arith.addf %12, %13 : vector<1x128xf32>
    %15 = math.tanh %14 : vector<1x128xf32>
    %16 = vector.extract_strided_slice %9 {offsets = [1, 0], sizes = [1, 128], strides = [1, 1]} : vector<8x128xf32> to vector<1x128xf32>
    %cst_14 = arith.constant dense<0.000000e+00> : vector<1x128xf32>
    %17 = tpu.matmul %15, %4, %cst_14 {dimension_numbers = #tpu.dot_dimension_numbers<[1], [0], [0], [1], [0, 0, 1, 1], [], []>} : vector<1x128xf32>, vector<128x128xf32>, vector<1x128xf32> -> vector<1x128xf32>
    %18 = arith.addf %16, %17 : vector<1x128xf32>
    %19 = math.tanh %18 : vector<1x128xf32>
    %20 = vector.extract_strided_slice %9 {offsets = [2, 0], sizes = [1, 128], strides = [1, 1]} : vector<8x128xf32> to vector<1x128xf32>
    %cst_15 = arith.constant dense<0.000000e+00> : vector<1x128xf32>
    %21 = tpu.matmul %19, %4, %cst_15 {dimension_numbers = #tpu.dot_dimension_numbers<[1], [0], [0], [1], [0, 0, 1, 1], [], []>} : vector<1x128xf32>, vector<128x128xf32>, vector<1x128xf32> -> vector<1x128xf32>
    %22 = arith.addf %20, %21 : vector<1x128xf32>
    %23 = math.tanh %22 : vector<1x128xf32>
    %24 = vector.extract_strided_slice %9 {offsets = [3, 0], sizes = [1, 128], strides = [1, 1]} : vector<8x128xf32> to vector<1x128xf32>
    %cst_16 = arith.constant dense<0.000000e+00> : vector<1x128xf32>
    %25 = tpu.matmul %23, %4, %cst_16 {dimension_numbers = #tpu.dot_dimension_numbers<[1], [0], [0], [1], [0, 0, 1, 1], [], []>} : vector<1x128xf32>, vector<128x128xf32>, vector<1x128xf32> -> vector<1x128xf32>
    %26 = arith.addf %24, %25 : vector<1x128xf32>
    %27 = math.tanh %26 : vector<1x128xf32>
    %28 = vector.extract_strided_slice %9 {offsets = [4, 0], sizes = [1, 128], strides = [1, 1]} : vector<8x128xf32> to vector<1x128xf32>
    %cst_17 = arith.constant dense<0.000000e+00> : vector<1x128xf32>
    %29 = tpu.matmul %27, %4, %cst_17 {dimension_numbers = #tpu.dot_dimension_numbers<[1], [0], [0], [1], [0, 0, 1, 1], [], []>} : vector<1x128xf32>, vector<128x128xf32>, vector<1x128xf32> -> vector<1x128xf32>
    %30 = arith.addf %28, %29 : vector<1x128xf32>
    %31 = math.tanh %30 : vector<1x128xf32>
    %32 = vector.extract_strided_slice %9 {offsets = [5, 0], sizes = [1, 128], strides = [1, 1]} : vector<8x128xf32> to vector<1x128xf32>
    %cst_18 = arith.constant dense<0.000000e+00> : vector<1x128xf32>
    %33 = tpu.matmul %31, %4, %cst_18 {dimension_numbers = #tpu.dot_dimension_numbers<[1], [0], [0], [1], [0, 0, 1, 1], [], []>} : vector<1x128xf32>, vector<128x128xf32>, vector<1x128xf32> -> vector<1x128xf32>
    %34 = arith.addf %32, %33 : vector<1x128xf32>
    %35 = math.tanh %34 : vector<1x128xf32>
    %36 = vector.extract_strided_slice %9 {offsets = [6, 0], sizes = [1, 128], strides = [1, 1]} : vector<8x128xf32> to vector<1x128xf32>
    %cst_19 = arith.constant dense<0.000000e+00> : vector<1x128xf32>
    %37 = tpu.matmul %35, %4, %cst_19 {dimension_numbers = #tpu.dot_dimension_numbers<[1], [0], [0], [1], [0, 0, 1, 1], [], []>} : vector<1x128xf32>, vector<128x128xf32>, vector<1x128xf32> -> vector<1x128xf32>
    %38 = arith.addf %36, %37 : vector<1x128xf32>
    %39 = math.tanh %38 : vector<1x128xf32>
    %40 = vector.extract_strided_slice %9 {offsets = [7, 0], sizes = [1, 128], strides = [1, 1]} : vector<8x128xf32> to vector<1x128xf32>
    %cst_20 = arith.constant dense<0.000000e+00> : vector<1x128xf32>
    %41 = tpu.matmul %39, %4, %cst_20 {dimension_numbers = #tpu.dot_dimension_numbers<[1], [0], [0], [1], [0, 0, 1, 1], [], []>} : vector<1x128xf32>, vector<128x128xf32>, vector<1x128xf32> -> vector<1x128xf32>
    %42 = arith.addf %40, %41 : vector<1x128xf32>
    %43 = math.tanh %42 : vector<1x128xf32>
    %44 = tpu.concatenate %15, %19, %23, %27, %31, %35, %39, %43 in 0 : vector<1x128xf32>, vector<1x128xf32>, vector<1x128xf32>, vector<1x128xf32>, vector<1x128xf32>, vector<1x128xf32>, vector<1x128xf32>, vector<1x128xf32> -> vector<8x128xf32>
    %c0_21 = arith.constant 0 : index
    %c0_22 = arith.constant 0 : index
    %c0_23 = arith.constant 0 : index
    %45 = vector.load %arg8[%c0_21, %c0_22, %c0_23] : memref<1x1x128xf32, #tpu.memory_space<vmem>>, vector<1x1x128xf32>
    %46 = vector.shape_cast %45 : vector<1x1x128xf32> to vector<1x128xf32>
    %47 = vector.shape_cast %43 : vector<1x128xf32> to vector<1x1x128xf32>
    tpu.vector_store %arg8[%c0_21, %c0_22, %c0_23], %47 {strides = array<i32>} : memref<1x1x128xf32, #tpu.memory_space<vmem>>, vector<1x1x128xf32>,
    %c0_24 = arith.constant 0 : index
    %c0_25 = arith.constant 0 : index
    %48 = vector.load %arg5[%c0_24, %c0_25] : memref<128x128xf32, #tpu.memory_space<vmem>>, vector<128x128xf32>
    %cst_26 = arith.constant dense<0.000000e+00> : vector<8x128xf32>
    %49 = tpu.matmul %44, %48, %cst_26 {dimension_numbers = #tpu.dot_dimension_numbers<[1], [0], [0], [1], [0, 0, 1, 1], [], []>} : vector<8x128xf32>, vector<128x128xf32>, vector<8x128xf32> -> vector<8x128xf32>
    %c0_27 = arith.constant 0 : index
    %c0_28 = arith.constant 0 : index
    %50 = vector.load %arg6[%c0_27, %c0_28] : memref<1x128xf32, #tpu.memory_space<vmem>>, vector<1x128xf32>
    %51 = vector.broadcast %50 : vector<1x128xf32> to vector<8x128xf32>
    %52 = arith.addf %49, %51 : vector<8x128xf32>
    %cst_29 = arith.constant dense<0xFF800000> : vector<128xf32>
    %53 = vector.multi_reduction <maximumf>, %52, %cst_29 [0] : vector<8x128xf32> to vector<128xf32>
    %54 = vector.shape_cast %53 : vector<128xf32> to vector<1x128xf32>
    %55 = vector.broadcast %54 : vector<1x128xf32> to vector<8x128xf32>
    %56 = arith.subf %52, %55 : vector<8x128xf32>
    %57 = math.exp %56 : vector<8x128xf32>
    %cst_30 = arith.constant dense<0.000000e+00> : vector<128xf32>
    %58 = vector.multi_reduction <add>, %57, %cst_30 [0] : vector<8x128xf32> to vector<128xf32>
    %59 = vector.shape_cast %58 : vector<128xf32> to vector<1x128xf32>
    %60 = math.log %59 : vector<1x128xf32>
    %61 = vector.broadcast %60 : vector<1x128xf32> to vector<8x128xf32>
    %62 = arith.subf %56, %61 : vector<8x128xf32>
    %c0_31 = arith.constant 0 : index
    %c0_32 = arith.constant 0 : index
    %63 = vector.load %arg7[%c0_31, %c0_32] : memref<8x128xf32, #tpu.memory_space<vmem>>, vector<8x128xf32>
    tpu.vector_store %arg7[%c0_31, %c0_32], %62 {strides = array<i32>} : memref<8x128xf32, #tpu.memory_space<vmem>>, vector<8x128xf32>,
    return
  }
}

</mosaic_0001>

<llo_original>
// kernel: rnn_forward.1
$region0: #{rnn_forward.1}
  #allocation0 [shape = 'u32[]', space=smem, size = 0x4, offset = 0x4, fixed_abs, tag = 'smem constant byte address 0x4 - core index']
  #allocation1 [shape = 'u32[144,128]{1,0:T(1,128)}', space=vmem, size = 0x12000, scoped, tag = 'internal scratch']
  %s0 = inlined_call_operand.vmem [shape: f32[8,128], index: 0, kind: input, shape index: {}]
  %s1 = inlined_call_operand.vmem [shape: f32[1,1,128], index: 1, kind: input, shape index: {}]
  %s2 = inlined_call_operand.vmem [shape: f32[1,128,128], index: 2, kind: input, shape index: {}]
  %s3 = inlined_call_operand.vmem [shape: f32[1,128,128], index: 3, kind: input, shape index: {}]
  %s4 = inlined_call_operand.vmem [shape: f32[1,1,128], index: 4, kind: input, shape index: {}]
  %s5 = inlined_call_operand.vmem [shape: f32[128,128], index: 5, kind: input, shape index: {}]
  %s6 = inlined_call_operand.vmem [shape: f32[1,128], index: 6, kind: input, shape index: {}]
  %s7 = inlined_call_operand.vmem [shape: f32[8,128], index: 7, kind: output, shape index: {0}]
  %s8 = inlined_call_operand.hbm [shape: f32[1,1,128], index: 8, kind: output, shape index: {1}]
  %9 = xla_tuple %s7, %s8
  %s10 = sld [smem:[#allocation0]]
  $region46: #{rnn_forward.1} parent=0
    _
  %s12 = ssub.s32 1, %s10
  %s13 = scalar_select 0, %s12, %s10
  $region1: #{rnn_forward.1} parent=0
    #allocation2 [shape = 'u8[512]{0}', space=vmem, size = 0x400, scoped, tag = 'output window, operand 1, single buffered']
    #allocation3 [shape = 's32[1]{0}', space=sflag, size = 0x4, scoped, tag = 'scoped memory for rnn_forward.1']
    %14 = vsyncpa [#allocation3], 0
    // Predicated region
    $region2: #{rnn_forward.1} parent=1 // pred_check
      _
    $region3: #{rnn_forward.1} parent=1 // pred_check_branch
      %16 = sbr.rel (0) target = $region5
    $region4: #{rnn_forward.1} parent=1 // pred_region
      _
    $region5: #{rnn_forward.1} parent=1 // pred_fallthru
      _
    // Predicated region
    $region6: #{rnn_forward.1} parent=1 // pred_check
      _
    $region7: #{rnn_forward.1} parent=1 // pred_check_branch
      %18 = sbr.rel (0) target = $region9
    $region8: #{rnn_forward.1} parent=1 // pred_region
      _
    $region9: #{rnn_forward.1} parent=1 // pred_fallthru
      _
    // Predicated region
    $region10: #{rnn_forward.1} parent=1 // pred_check
      _
    $region11: #{rnn_forward.1} parent=1 // pred_check_branch
      %20 = sbr.rel (0) target = $region13
    $region12: #{rnn_forward.1} parent=1 // pred_region
      _
    $region13: #{rnn_forward.1} parent=1 // pred_fallthru
      _
    // Predicated region
    $region14: #{rnn_forward.1} parent=1 // pred_check
      _
    $region15: #{rnn_forward.1} parent=1 // pred_check_branch
      %22 = sbr.rel (0) target = $region17
    $region16: #{rnn_forward.1} parent=1 // pred_region
      _
    $region17: #{rnn_forward.1} parent=1 // pred_fallthru
      _
    // Predicated region
    $region18: #{rnn_forward.1} parent=1 // pred_check
      _
    $region19: #{rnn_forward.1} parent=1 // pred_check_branch
      %24 = sbr.rel (0) target = $region21
    $region20: #{rnn_forward.1} parent=1 // pred_region
      _
    $region21: #{rnn_forward.1} parent=1 // pred_fallthru
      _
    // Predicated region
    $region22: #{rnn_forward.1} parent=1 // pred_check
      _
    $region23: #{rnn_forward.1} parent=1 // pred_check_branch
      %26 = sbr.rel (0) target = $region25
    $region24: #{rnn_forward.1} parent=1 // pred_region
      _
    $region25: #{rnn_forward.1} parent=1 // pred_fallthru
      _
    // Predicated region
    $region26: #{rnn_forward.1} parent=1 // pred_check
      _
    $region27: #{rnn_forward.1} parent=1 // pred_check_branch
      %28 = sbr.rel (0) target = $region29
    $region28: #{rnn_forward.1} parent=1 // pred_region
      _
    $region29: #{rnn_forward.1} parent=1 // pred_fallthru
      _
    %v29 = vld [vmem:[%s0] sm:$0xff]
    %v30 = vld [vmem:[%s2] sm:$0xff]
    %v31 = vld [vmem:[%s2 + $0x8] sm:$0xff]
    %v32 = vld [vmem:[%s2 + $0x10] sm:$0xff]
    %v33 = vld [vmem:[%s2 + $0x18] sm:$0xff]
    %v34 = vld [vmem:[%s2 + $0x20] sm:$0xff]
    %v35 = vld [vmem:[%s2 + $0x28] sm:$0xff]
    %v36 = vld [vmem:[%s2 + $0x30] sm:$0xff]
    %v37 = vld [vmem:[%s2 + $0x38] sm:$0xff]
    %v38 = vld [vmem:[%s2 + $0x40] sm:$0xff]
    %v39 = vld [vmem:[%s2 + $0x48] sm:$0xff]
    %v40 = vld [vmem:[%s2 + $0x50] sm:$0xff]
    %v41 = vld [vmem:[%s2 + $0x58] sm:$0xff]
    %v42 = vld [vmem:[%s2 + $0x60] sm:$0xff]
    %v43 = vld [vmem:[%s2 + $0x68] sm:$0xff]
    %v44 = vld [vmem:[%s2 + $0x70] sm:$0xff]
    %v45 = vld [vmem:[%s2 + $0x78] sm:$0xff]
    %v46 = vld [vmem:[%s3] sm:$0xff]
    %v47 = vld [vmem:[%s3 + $0x8] sm:$0xff]
    %v48 = vld [vmem:[%s3 + $0x10] sm:$0xff]
    %v49 = vld [vmem:[%s3 + $0x18] sm:$0xff]
    %v50 = vld [vmem:[%s3 + $0x20] sm:$0xff]
    %v51 = vld [vmem:[%s3 + $0x28] sm:$0xff]
    %v52 = vld [vmem:[%s3 + $0x30] sm:$0xff]
    %v53 = vld [vmem:[%s3 + $0x38] sm:$0xff]
    %v54 = vld [vmem:[%s3 + $0x40] sm:$0xff]
    %v55 = vld [vmem:[%s3 + $0x48] sm:$0xff]
    %v56 = vld [vmem:[%s3 + $0x50] sm:$0xff]
    %v57 = vld [vmem:[%s3 + $0x58] sm:$0xff]
    %v58 = vld [vmem:[%s3 + $0x60] sm:$0xff]
    %v59 = vld [vmem:[%s3 + $0x68] sm:$0xff]
    %v60 = vld [vmem:[%s3 + $0x70] sm:$0xff]
    %v61 = vld [vmem:[%s3 + $0x78] sm:$0xff]
    %v62 = vld [vmem:[%s4] sm:$0x1]
    %v64 = vlaneseq
    %v65 = vshrl.u32 %v64, 7
    %v66 = vsub.s32 0, %v65
    %v67 = vrot.slane %v62, %v66
    %69 = vmatprep.subr.mxu0 0.0
    %70 = vmatpush1.msra.mxu0 %v30
    %71 = vmatprep.subr.mxu0 0.0
    %72 = vmatpush1.msra.mxu0 %v31
    %73 = vmatprep.subr.mxu0 0.0
    %74 = vmatpush1.msra.mxu0 %v32
    %75 = vmatprep.subr.mxu0 0.0
    %76 = vmatpush1.msra.mxu0 %v33
    %77 = vmatprep.subr.mxu0 0.0
    %78 = vmatpush1.msra.mxu0 %v34
    %79 = vmatprep.subr.mxu0 0.0
    %80 = vmatpush1.msra.mxu0 %v35
    %81 = vmatprep.subr.mxu0 0.0
    %82 = vmatpush1.msra.mxu0 %v36
    %83 = vmatprep.subr.mxu0 0.0
    %84 = vmatpush1.msra.mxu0 %v37
    %85 = vmatprep.subr.mxu0 0.0
    %86 = vmatpush1.msra.mxu0 %v38
    %87 = vmatprep.subr.mxu0 0.0
    %88 = vmatpush1.msra.mxu0 %v39
    %89 = vmatprep.subr.mxu0 0.0
    %90 = vmatpush1.msra.mxu0 %v40
    %91 = vmatprep.subr.mxu0 0.0
    %92 = vmatpush1.msra.mxu0 %v41
    %93 = vmatprep.subr.mxu0 0.0
    %94 = vmatpush1.msra.mxu0 %v42
    %95 = vmatprep.subr.mxu0 0.0
    %96 = vmatpush1.msra.mxu0 %v43
    %97 = vmatprep.subr.mxu0 0.0
    %98 = vmatpush1.msra.mxu0 %v44
    %99 = vmatprep.subr.mxu0 0.0
    %100 = vmatpush1.msra.mxu0 %v45
    %101 = vmatprep.subr.mxu0 0.0
    %102 = vmatpush1.msra.mxu0 0.0
    %103 = vmatprep.subr.mxu0 0.0
    %104 = vmatpush1.msra.mxu0 0.0
    %105 = vmatprep.subr.mxu0 0.0
    %106 = vmatpush1.msra.mxu0 0.0
    %107 = vmatprep.subr.mxu0 0.0
    %108 = vmatpush1.msra.mxu0 0.0
    %109 = vmatprep.subr.mxu0 0.0
    %110 = vmatpush1.msra.mxu0 0.0
    %111 = vmatprep.subr.mxu0 0.0
    %112 = vmatpush1.msra.mxu0 0.0
    %113 = vmatprep.subr.mxu0 0.0
    %114 = vmatpush1.msra.mxu0 0.0
    %115 = vmatprep.subr.mxu0 0.0
    %116 = vmatpush1.msra.mxu0 0.0
    %117 = vmatprep.subr.mxu0 0.0
    %118 = vmatpush1.msra.mxu0 0.0
    %119 = vmatprep.subr.mxu0 0.0
    %120 = vmatpush1.msra.mxu0 0.0
    %121 = vmatprep.subr.mxu0 0.0
    %122 = vmatpush1.msra.mxu0 0.0
    %123 = vmatprep.subr.mxu0 0.0
    %124 = vmatpush1.msra.mxu0 0.0
    %125 = vmatprep.subr.mxu0 0.0
    %126 = vmatpush1.msra.mxu0 0.0
    %127 = vmatprep.subr.mxu0 0.0
    %128 = vmatpush1.msra.mxu0 0.0
    %129 = vmatprep.subr.mxu0 0.0
    %130 = vmatpush1.msra.mxu0 0.0
    %131 = vmatprep.subr.mxu0 0.0
    %132 = vmatpush1.msra.mxu0 0.0
    %133 = vmatprep.mubr.f32.mxu0 0.0
    %134 = vmatmul.mubr.f32.gmra.mrb[0].mxu0 %v29
    %v135 = vpop.f32.mrb[0].mxu0
    %v136 = vadd.f32 %v67, %v135
    %v137 = vpop.f32.mrb[0].mxu0
    %138 = vdwg.mxu0
    %v139 = vld [vmem:[%s1] sm:$0x1]
    %140 = vmatprep.subr.mxu0 0.0
    %141 = vmatpush1.msra.mxu0 %v46
    %142 = vmatprep.subr.mxu0 0.0
    %143 = vmatpush1.msra.mxu0 %v47
    %144 = vmatprep.subr.mxu0 0.0
    %145 = vmatpush1.msra.mxu0 %v48
    %146 = vmatprep.subr.mxu0 0.0
    %147 = vmatpush1.msra.mxu0 %v49
    %148 = vmatprep.subr.mxu0 0.0
    %149 = vmatpush1.msra.mxu0 %v50
    %150 = vmatprep.subr.mxu0 0.0
    %151 = vmatpush1.msra.mxu0 %v51
    %152 = vmatprep.subr.mxu0 0.0
    %153 = vmatpush1.msra.mxu0 %v52
    %154 = vmatprep.subr.mxu0 0.0
    %155 = vmatpush1.msra.mxu0 %v53
    %156 = vmatprep.subr.mxu0 0.0
    %157 = vmatpush1.msra.mxu0 %v54
    %158 = vmatprep.subr.mxu0 0.0
    %159 = vmatpush1.msra.mxu0 %v55
    %160 = vmatprep.subr.mxu0 0.0
    %161 = vmatpush1.msra.mxu0 %v56
    %162 = vmatprep.subr.mxu0 0.0
    %163 = vmatpush1.msra.mxu0 %v57
    %164 = vmatprep.subr.mxu0 0.0
    %165 = vmatpush1.msra.mxu0 %v58
    %166 = vmatprep.subr.mxu0 0.0
    %167 = vmatpush1.msra.mxu0 %v59
    %168 = vmatprep.subr.mxu0 0.0
    %169 = vmatpush1.msra.mxu0 %v60
    %170 = vmatprep.subr.mxu0 0.0
    %171 = vmatpush1.msra.mxu0 %v61
    %172 = vmatprep.subr.mxu0 0.0
    %173 = vmatpush1.msra.mxu0 0.0
    %174 = vmatprep.subr.mxu0 0.0
    %175 = vmatpush1.msra.mxu0 0.0
    %176 = vmatprep.subr.mxu0 0.0
    %177 = vmatpush1.msra.mxu0 0.0
    %178 = vmatprep.subr.mxu0 0.0
    %179 = vmatpush1.msra.mxu0 0.0
    %180 = vmatprep.subr.mxu0 0.0
    %181 = vmatpush1.msra.mxu0 0.0
    %182 = vmatprep.subr.mxu0 0.0
    %183 = vmatpush1.msra.mxu0 0.0
    %184 = vmatprep.subr.mxu0 0.0
    %185 = vmatpush1.msra.mxu0 0.0
    %186 = vmatprep.subr.mxu0 0.0
    %187 = vmatpush1.msra.mxu0 0.0
    %188 = vmatprep.subr.mxu0 0.0
    %189 = vmatpush1.msra.mxu0 0.0
    %190 = vmatprep.subr.mxu0 0.0
    %191 = vmatpush1.msra.mxu0 0.0
    %192 = vmatprep.subr.mxu0 0.0
    %193 = vmatpush1.msra.mxu0 0.0
    %194 = vmatprep.subr.mxu0 0.0
    %195 = vmatpush1.msra.mxu0 0.0
    %196 = vmatprep.subr.mxu0 0.0
    %197 = vmatpush1.msra.mxu0 0.0
    %198 = vmatprep.subr.mxu0 0.0
    %199 = vmatpush1.msra.mxu0 0.0
    %200 = vmatprep.subr.mxu0 0.0
    %201 = vmatpush1.msra.mxu0 0.0
    %202 = vmatprep.subr.mxu0 0.0
    %203 = vmatpush1.msra.mxu0 0.0
    %204 = vmatprep.mubr.f32.mxu0 0.0
    %205 = vmatmul.mubr.f32.gmra.mrb[0].mxu0 %v139
    %v206 = vpop.f32.mrb[0].mxu0
    %v207 = vadd.f32 0.0, %v206
    %v208 = vpop.f32.mrb[0].mxu0
    %209 = vdwg.mxu0
    %v210 = vadd.f32 %v136, %v207
    %v211 = vtanh.pop %v210
    %212 = vmatprep.subr.mxu0 0.0
    %213 = vmatpush1.msra.mxu0 %v46
    %214 = vmatprep.subr.mxu0 0.0
    %215 = vmatpush1.msra.mxu0 %v47
    %216 = vmatprep.subr.mxu0 0.0
    %217 = vmatpush1.msra.mxu0 %v48
    %218 = vmatprep.subr.mxu0 0.0
    %219 = vmatpush1.msra.mxu0 %v49
    %220 = vmatprep.subr.mxu0 0.0
    %221 = vmatpush1.msra.mxu0 %v50
    %222 = vmatprep.subr.mxu0 0.0
    %223 = vmatpush1.msra.mxu0 %v51
    %224 = vmatprep.subr.mxu0 0.0
    %225 = vmatpush1.msra.mxu0 %v52
    %226 = vmatprep.subr.mxu0 0.0
    %227 = vmatpush1.msra.mxu0 %v53
    %228 = vmatprep.subr.mxu0 0.0
    %229 = vmatpush1.msra.mxu0 %v54
    %230 = vmatprep.subr.mxu0 0.0
    %231 = vmatpush1.msra.mxu0 %v55
    %232 = vmatprep.subr.mxu0 0.0
    %233 = vmatpush1.msra.mxu0 %v56
    %234 = vmatprep.subr.mxu0 0.0
    %235 = vmatpush1.msra.mxu0 %v57
    %236 = vmatprep.subr.mxu0 0.0
    %237 = vmatpush1.msra.mxu0 %v58
    %238 = vmatprep.subr.mxu0 0.0
    %239 = vmatpush1.msra.mxu0 %v59
    %240 = vmatprep.subr.mxu0 0.0
    %241 = vmatpush1.msra.mxu0 %v60
    %242 = vmatprep.subr.mxu0 0.0
    %243 = vmatpush1.msra.mxu0 %v61
    %244 = vmatprep.subr.mxu0 0.0
    %245 = vmatpush1.msra.mxu0 0.0
    %246 = vmatprep.subr.mxu0 0.0
    %247 = vmatpush1.msra.mxu0 0.0
    %248 = vmatprep.subr.mxu0 0.0
    %249 = vmatpush1.msra.mxu0 0.0
    %250 = vmatprep.subr.mxu0 0.0
    %251 = vmatpush1.msra.mxu0 0.0
    %252 = vmatprep.subr.mxu0 0.0
    %253 = vmatpush1.msra.mxu0 0.0
    %254 = vmatprep.subr.mxu0 0.0
    %255 = vmatpush1.msra.mxu0 0.0
    %256 = vmatprep.subr.mxu0 0.0
    %257 = vmatpush1.msra.mxu0 0.0
    %258 = vmatprep.subr.mxu0 0.0
    %259 = vmatpush1.msra.mxu0 0.0
    %260 = vmatprep.subr.mxu0 0.0
    %261 = vmatpush1.msra.mxu0 0.0
    %262 = vmatprep.subr.mxu0 0.0
    %263 = vmatpush1.msra.mxu0 0.0
    %264 = vmatprep.subr.mxu0 0.0
    %265 = vmatpush1.msra.mxu0 0.0
    %266 = vmatprep.subr.mxu0 0.0
    %267 = vmatpush1.msra.mxu0 0.0
    %268 = vmatprep.subr.mxu0 0.0
    %269 = vmatpush1.msra.mxu0 0.0
    %270 = vmatprep.subr.mxu0 0.0
    %271 = vmatpush1.msra.mxu0 0.0
    %272 = vmatprep.subr.mxu0 0.0
    %273 = vmatpush1.msra.mxu0 0.0
    %274 = vmatprep.subr.mxu0 0.0
    %275 = vmatpush1.msra.mxu0 0.0
    %276 = vmatprep.mubr.f32.mxu0 0.0
    %277 = vmatmul.mubr.f32.gmra.mrb[0].mxu0 %v211
    %v278 = vpop.f32.mrb[0].mxu0
    %v279 = vadd.f32 0.0, %v278
    %v280 = vpop.f32.mrb[0].mxu0
    %281 = vdwg.mxu0
    %v283 = vrot.slane %v279, 7
    %v285 = vadd.f32 %v136, %v283
    %v286 = vtanh.pop %v285
    %v288 = vrot.slane %v286, 1
    %290 = vmatprep.subr.mxu0 0.0
    %291 = vmatpush1.msra.mxu0 %v46
    %292 = vmatprep.subr.mxu0 0.0
    %293 = vmatpush1.msra.mxu0 %v47
    %294 = vmatprep.subr.mxu0 0.0
    %295 = vmatpush1.msra.mxu0 %v48
    %296 = vmatprep.subr.mxu0 0.0
    %297 = vmatpush1.msra.mxu0 %v49
    %298 = vmatprep.subr.mxu0 0.0
    %299 = vmatpush1.msra.mxu0 %v50
    %300 = vmatprep.subr.mxu0 0.0
    %301 = vmatpush1.msra.mxu0 %v51
    %302 = vmatprep.subr.mxu0 0.0
    %303 = vmatpush1.msra.mxu0 %v52
    %304 = vmatprep.subr.mxu0 0.0
    %305 = vmatpush1.msra.mxu0 %v53
    %306 = vmatprep.subr.mxu0 0.0
    %307 = vmatpush1.msra.mxu0 %v54
    %308 = vmatprep.subr.mxu0 0.0
    %309 = vmatpush1.msra.mxu0 %v55
    %310 = vmatprep.subr.mxu0 0.0
    %311 = vmatpush1.msra.mxu0 %v56
    %312 = vmatprep.subr.mxu0 0.0
    %313 = vmatpush1.msra.mxu0 %v57
    %314 = vmatprep.subr.mxu0 0.0
    %315 = vmatpush1.msra.mxu0 %v58
    %316 = vmatprep.subr.mxu0 0.0
    %317 = vmatpush1.msra.mxu0 %v59
    %318 = vmatprep.subr.mxu0 0.0
    %319 = vmatpush1.msra.mxu0 %v60
    %320 = vmatprep.subr.mxu0 0.0
    %321 = vmatpush1.msra.mxu0 %v61
    %322 = vmatprep.subr.mxu0 0.0
    %323 = vmatpush1.msra.mxu0 0.0
    %324 = vmatprep.subr.mxu0 0.0
    %325 = vmatpush1.msra.mxu0 0.0
    %326 = vmatprep.subr.mxu0 0.0
    %327 = vmatpush1.msra.mxu0 0.0
    %328 = vmatprep.subr.mxu0 0.0
    %329 = vmatpush1.msra.mxu0 0.0
    %330 = vmatprep.subr.mxu0 0.0
    %331 = vmatpush1.msra.mxu0 0.0
    %332 = vmatprep.subr.mxu0 0.0
    %333 = vmatpush1.msra.mxu0 0.0
    %334 = vmatprep.subr.mxu0 0.0
    %335 = vmatpush1.msra.mxu0 0.0
    %336 = vmatprep.subr.mxu0 0.0
    %337 = vmatpush1.msra.mxu0 0.0
    %338 = vmatprep.subr.mxu0 0.0
    %339 = vmatpush1.msra.mxu0 0.0
    %340 = vmatprep.subr.mxu0 0.0
    %341 = vmatpush1.msra.mxu0 0.0
    %342 = vmatprep.subr.mxu0 0.0
    %343 = vmatpush1.msra.mxu0 0.0
    %344 = vmatprep.subr.mxu0 0.0
    %345 = vmatpush1.msra.mxu0 0.0
    %346 = vmatprep.subr.mxu0 0.0
    %347 = vmatpush1.msra.mxu0 0.0
    %348 = vmatprep.subr.mxu0 0.0
    %349 = vmatpush1.msra.mxu0 0.0
    %350 = vmatprep.subr.mxu0 0.0
    %351 = vmatpush1.msra.mxu0 0.0
    %352 = vmatprep.subr.mxu0 0.0
    %353 = vmatpush1.msra.mxu0 0.0
    %354 = vmatprep.mubr.f32.mxu0 0.0
    %355 = vmatmul.mubr.f32.gmra.mrb[0].mxu0 %v288
    %v356 = vpop.f32.mrb[0].mxu0
    %v357 = vadd.f32 0.0, %v356
    %v358 = vpop.f32.mrb[0].mxu0
    %359 = vdwg.mxu0
    %v361 = vrot.slane %v357, 6
    %v363 = vadd.f32 %v136, %v361
    %v364 = vtanh.pop %v363
    %v366 = vrot.slane %v364, 2
    %368 = vmatprep.subr.mxu0 0.0
    %369 = vmatpush1.msra.mxu0 %v46
    %370 = vmatprep.subr.mxu0 0.0
    %371 = vmatpush1.msra.mxu0 %v47
    %372 = vmatprep.subr.mxu0 0.0
    %373 = vmatpush1.msra.mxu0 %v48
    %374 = vmatprep.subr.mxu0 0.0
    %375 = vmatpush1.msra.mxu0 %v49
    %376 = vmatprep.subr.mxu0 0.0
    %377 = vmatpush1.msra.mxu0 %v50
    %378 = vmatprep.subr.mxu0 0.0
    %379 = vmatpush1.msra.mxu0 %v51
    %380 = vmatprep.subr.mxu0 0.0
    %381 = vmatpush1.msra.mxu0 %v52
    %382 = vmatprep.subr.mxu0 0.0
    %383 = vmatpush1.msra.mxu0 %v53
    %384 = vmatprep.subr.mxu0 0.0
    %385 = vmatpush1.msra.mxu0 %v54
    %386 = vmatprep.subr.mxu0 0.0
    %387 = vmatpush1.msra.mxu0 %v55
    %388 = vmatprep.subr.mxu0 0.0
    %389 = vmatpush1.msra.mxu0 %v56
    %390 = vmatprep.subr.mxu0 0.0
    %391 = vmatpush1.msra.mxu0 %v57
    %392 = vmatprep.subr.mxu0 0.0
    %393 = vmatpush1.msra.mxu0 %v58
    %394 = vmatprep.subr.mxu0 0.0
    %395 = vmatpush1.msra.mxu0 %v59
    %396 = vmatprep.subr.mxu0 0.0
    %397 = vmatpush1.msra.mxu0 %v60
    %398 = vmatprep.subr.mxu0 0.0
    %399 = vmatpush1.msra.mxu0 %v61
    %400 = vmatprep.subr.mxu0 0.0
    %401 = vmatpush1.msra.mxu0 0.0
    %402 = vmatprep.subr.mxu0 0.0
    %403 = vmatpush1.msra.mxu0 0.0
    %404 = vmatprep.subr.mxu0 0.0
    %405 = vmatpush1.msra.mxu0 0.0
    %406 = vmatprep.subr.mxu0 0.0
    %407 = vmatpush1.msra.mxu0 0.0
    %408 = vmatprep.subr.mxu0 0.0
    %409 = vmatpush1.msra.mxu0 0.0
    %410 = vmatprep.subr.mxu0 0.0
    %411 = vmatpush1.msra.mxu0 0.0
    %412 = vmatprep.subr.mxu0 0.0
    %413 = vmatpush1.msra.mxu0 0.0
    %414 = vmatprep.subr.mxu0 0.0
    %415 = vmatpush1.msra.mxu0 0.0
    %416 = vmatprep.subr.mxu0 0.0
    %417 = vmatpush1.msra.mxu0 0.0
    %418 = vmatprep.subr.mxu0 0.0
    %419 = vmatpush1.msra.mxu0 0.0
    %420 = vmatprep.subr.mxu0 0.0
    %421 = vmatpush1.msra.mxu0 0.0
    %422 = vmatprep.subr.mxu0 0.0
    %423 = vmatpush1.msra.mxu0 0.0
    %424 = vmatprep.subr.mxu0 0.0
    %425 = vmatpush1.msra.mxu0 0.0
    %426 = vmatprep.subr.mxu0 0.0
    %427 = vmatpush1.msra.mxu0 0.0
    %428 = vmatprep.subr.mxu0 0.0
    %429 = vmatpush1.msra.mxu0 0.0
    %430 = vmatprep.subr.mxu0 0.0
    %431 = vmatpush1.msra.mxu0 0.0
    %432 = vmatprep.mubr.f32.mxu0 0.0
    %433 = vmatmul.mubr.f32.gmra.mrb[0].mxu0 %v366
    %v434 = vpop.f32.mrb[0].mxu0
    %v435 = vadd.f32 0.0, %v434
    %v436 = vpop.f32.mrb[0].mxu0
    %437 = vdwg.mxu0
    %v439 = vrot.slane %v435, 5
    %v441 = vadd.f32 %v136, %v439
    %v442 = vtanh.pop %v441
    %v444 = vrot.slane %v442, 3
    %446 = vmatprep.subr.mxu0 0.0
    %447 = vmatpush1.msra.mxu0 %v46
    %448 = vmatprep.subr.mxu0 0.0
    %449 = vmatpush1.msra.mxu0 %v47
    %450 = vmatprep.subr.mxu0 0.0
    %451 = vmatpush1.msra.mxu0 %v48
    %452 = vmatprep.subr.mxu0 0.0
    %453 = vmatpush1.msra.mxu0 %v49
    %454 = vmatprep.subr.mxu0 0.0
    %455 = vmatpush1.msra.mxu0 %v50
    %456 = vmatprep.subr.mxu0 0.0
    %457 = vmatpush1.msra.mxu0 %v51
    %458 = vmatprep.subr.mxu0 0.0
    %459 = vmatpush1.msra.mxu0 %v52
    %460 = vmatprep.subr.mxu0 0.0
    %461 = vmatpush1.msra.mxu0 %v53
    %462 = vmatprep.subr.mxu0 0.0
    %463 = vmatpush1.msra.mxu0 %v54
    %464 = vmatprep.subr.mxu0 0.0
    %465 = vmatpush1.msra.mxu0 %v55
    %466 = vmatprep.subr.mxu0 0.0
    %467 = vmatpush1.msra.mxu0 %v56
    %468 = vmatprep.subr.mxu0 0.0
    %469 = vmatpush1.msra.mxu0 %v57
    %470 = vmatprep.subr.mxu0 0.0
    %471 = vmatpush1.msra.mxu0 %v58
    %472 = vmatprep.subr.mxu0 0.0
    %473 = vmatpush1.msra.mxu0 %v59
    %474 = vmatprep.subr.mxu0 0.0
    %475 = vmatpush1.msra.mxu0 %v60
    %476 = vmatprep.subr.mxu0 0.0
    %477 = vmatpush1.msra.mxu0 %v61
    %478 = vmatprep.subr.mxu0 0.0
    %479 = vmatpush1.msra.mxu0 0.0
    %480 = vmatprep.subr.mxu0 0.0
    %481 = vmatpush1.msra.mxu0 0.0
    %482 = vmatprep.subr.mxu0 0.0
    %483 = vmatpush1.msra.mxu0 0.0
    %484 = vmatprep.subr.mxu0 0.0
    %485 = vmatpush1.msra.mxu0 0.0
    %486 = vmatprep.subr.mxu0 0.0
    %487 = vmatpush1.msra.mxu0 0.0
    %488 = vmatprep.subr.mxu0 0.0
    %489 = vmatpush1.msra.mxu0 0.0
    %490 = vmatprep.subr.mxu0 0.0
    %491 = vmatpush1.msra.mxu0 0.0
    %492 = vmatprep.subr.mxu0 0.0
    %493 = vmatpush1.msra.mxu0 0.0
    %494 = vmatprep.subr.mxu0 0.0
    %495 = vmatpush1.msra.mxu0 0.0
    %496 = vmatprep.subr.mxu0 0.0
    %497 = vmatpush1.msra.mxu0 0.0
    %498 = vmatprep.subr.mxu0 0.0
    %499 = vmatpush1.msra.mxu0 0.0
    %500 = vmatprep.subr.mxu0 0.0
    %501 = vmatpush1.msra.mxu0 0.0
    %502 = vmatprep.subr.mxu0 0.0
    %503 = vmatpush1.msra.mxu0 0.0
    %504 = vmatprep.subr.mxu0 0.0
    %505 = vmatpush1.msra.mxu0 0.0
    %506 = vmatprep.subr.mxu0 0.0
    %507 = vmatpush1.msra.mxu0 0.0
    %508 = vmatprep.subr.mxu0 0.0
    %509 = vmatpush1.msra.mxu0 0.0
    %510 = vmatprep.mubr.f32.mxu0 0.0
    %511 = vmatmul.mubr.f32.gmra.mrb[0].mxu0 %v444
    %v512 = vpop.f32.mrb[0].mxu0
    %v513 = vadd.f32 0.0, %v512
    %v514 = vpop.f32.mrb[0].mxu0
    %515 = vdwg.mxu0
    %v517 = vrot.slane %v513, 4
    %v519 = vadd.f32 %v136, %v517
    %v520 = vtanh.pop %v519
    %v522 = vrot.slane %v520, 4
    %524 = vmatprep.subr.mxu0 0.0
    %525 = vmatpush1.msra.mxu0 %v46
    %526 = vmatprep.subr.mxu0 0.0
    %527 = vmatpush1.msra.mxu0 %v47
    %528 = vmatprep.subr.mxu0 0.0
    %529 = vmatpush1.msra.mxu0 %v48
    %530 = vmatprep.subr.mxu0 0.0
    %531 = vmatpush1.msra.mxu0 %v49
    %532 = vmatprep.subr.mxu0 0.0
    %533 = vmatpush1.msra.mxu0 %v50
    %534 = vmatprep.subr.mxu0 0.0
    %535 = vmatpush1.msra.mxu0 %v51
    %536 = vmatprep.subr.mxu0 0.0
    %537 = vmatpush1.msra.mxu0 %v52
    %538 = vmatprep.subr.mxu0 0.0
    %539 = vmatpush1.msra.mxu0 %v53
    %540 = vmatprep.subr.mxu0 0.0
    %541 = vmatpush1.msra.mxu0 %v54
    %542 = vmatprep.subr.mxu0 0.0
    %543 = vmatpush1.msra.mxu0 %v55
    %544 = vmatprep.subr.mxu0 0.0
    %545 = vmatpush1.msra.mxu0 %v56
    %546 = vmatprep.subr.mxu0 0.0
    %547 = vmatpush1.msra.mxu0 %v57
    %548 = vmatprep.subr.mxu0 0.0
    %549 = vmatpush1.msra.mxu0 %v58
    %550 = vmatprep.subr.mxu0 0.0
    %551 = vmatpush1.msra.mxu0 %v59
    %552 = vmatprep.subr.mxu0 0.0
    %553 = vmatpush1.msra.mxu0 %v60
    %554 = vmatprep.subr.mxu0 0.0
    %555 = vmatpush1.msra.mxu0 %v61
    %556 = vmatprep.subr.mxu0 0.0
    %557 = vmatpush1.msra.mxu0 0.0
    %558 = vmatprep.subr.mxu0 0.0
    %559 = vmatpush1.msra.mxu0 0.0
    %560 = vmatprep.subr.mxu0 0.0
    %561 = vmatpush1.msra.mxu0 0.0
    %562 = vmatprep.subr.mxu0 0.0
    %563 = vmatpush1.msra.mxu0 0.0
    %564 = vmatprep.subr.mxu0 0.0
    %565 = vmatpush1.msra.mxu0 0.0
    %566 = vmatprep.subr.mxu0 0.0
    %567 = vmatpush1.msra.mxu0 0.0
    %568 = vmatprep.subr.mxu0 0.0
    %569 = vmatpush1.msra.mxu0 0.0
    %570 = vmatprep.subr.mxu0 0.0
    %571 = vmatpush1.msra.mxu0 0.0
    %572 = vmatprep.subr.mxu0 0.0
    %573 = vmatpush1.msra.mxu0 0.0
    %574 = vmatprep.subr.mxu0 0.0
    %575 = vmatpush1.msra.mxu0 0.0
    %576 = vmatprep.subr.mxu0 0.0
    %577 = vmatpush1.msra.mxu0 0.0
    %578 = vmatprep.subr.mxu0 0.0
    %579 = vmatpush1.msra.mxu0 0.0
    %580 = vmatprep.subr.mxu0 0.0
    %581 = vmatpush1.msra.mxu0 0.0
    %582 = vmatprep.subr.mxu0 0.0
    %583 = vmatpush1.msra.mxu0 0.0
    %584 = vmatprep.subr.mxu0 0.0
    %585 = vmatpush1.msra.mxu0 0.0
    %586 = vmatprep.subr.mxu0 0.0
    %587 = vmatpush1.msra.mxu0 0.0
    %588 = vmatprep.mubr.f32.mxu0 0.0
    %589 = vmatmul.mubr.f32.gmra.mrb[0].mxu0 %v522
    %v590 = vpop.f32.mrb[0].mxu0
    %v591 = vadd.f32 0.0, %v590
    %v592 = vpop.f32.mrb[0].mxu0
    %593 = vdwg.mxu0
    %v595 = vrot.slane %v591, 3
    %v597 = vadd.f32 %v136, %v595
    %v598 = vtanh.pop %v597
    %v600 = vrot.slane %v598, 5
    %602 = vmatprep.subr.mxu0 0.0
    %603 = vmatpush1.msra.mxu0 %v46
    %604 = vmatprep.subr.mxu0 0.0
    %605 = vmatpush1.msra.mxu0 %v47
    %606 = vmatprep.subr.mxu0 0.0
    %607 = vmatpush1.msra.mxu0 %v48
    %608 = vmatprep.subr.mxu0 0.0
    %609 = vmatpush1.msra.mxu0 %v49
    %610 = vmatprep.subr.mxu0 0.0
    %611 = vmatpush1.msra.mxu0 %v50
    %612 = vmatprep.subr.mxu0 0.0
    %613 = vmatpush1.msra.mxu0 %v51
    %614 = vmatprep.subr.mxu0 0.0
    %615 = vmatpush1.msra.mxu0 %v52
    %616 = vmatprep.subr.mxu0 0.0
    %617 = vmatpush1.msra.mxu0 %v53
    %618 = vmatprep.subr.mxu0 0.0
    %619 = vmatpush1.msra.mxu0 %v54
    %620 = vmatprep.subr.mxu0 0.0
    %621 = vmatpush1.msra.mxu0 %v55
    %622 = vmatprep.subr.mxu0 0.0
    %623 = vmatpush1.msra.mxu0 %v56
    %624 = vmatprep.subr.mxu0 0.0
    %625 = vmatpush1.msra.mxu0 %v57
    %626 = vmatprep.subr.mxu0 0.0
    %627 = vmatpush1.msra.mxu0 %v58
    %628 = vmatprep.subr.mxu0 0.0
    %629 = vmatpush1.msra.mxu0 %v59
    %630 = vmatprep.subr.mxu0 0.0
    %631 = vmatpush1.msra.mxu0 %v60
    %632 = vmatprep.subr.mxu0 0.0
    %633 = vmatpush1.msra.mxu0 %v61
    %634 = vmatprep.subr.mxu0 0.0
    %635 = vmatpush1.msra.mxu0 0.0
    %636 = vmatprep.subr.mxu0 0.0
    %637 = vmatpush1.msra.mxu0 0.0
    %638 = vmatprep.subr.mxu0 0.0
    %639 = vmatpush1.msra.mxu0 0.0
    %640 = vmatprep.subr.mxu0 0.0
    %641 = vmatpush1.msra.mxu0 0.0
    %642 = vmatprep.subr.mxu0 0.0
    %643 = vmatpush1.msra.mxu0 0.0
    %644 = vmatprep.subr.mxu0 0.0
    %645 = vmatpush1.msra.mxu0 0.0
    %646 = vmatprep.subr.mxu0 0.0
    %647 = vmatpush1.msra.mxu0 0.0
    %648 = vmatprep.subr.mxu0 0.0
    %649 = vmatpush1.msra.mxu0 0.0
    %650 = vmatprep.subr.mxu0 0.0
    %651 = vmatpush1.msra.mxu0 0.0
    %652 = vmatprep.subr.mxu0 0.0
    %653 = vmatpush1.msra.mxu0 0.0
    %654 = vmatprep.subr.mxu0 0.0
    %655 = vmatpush1.msra.mxu0 0.0
    %656 = vmatprep.subr.mxu0 0.0
    %657 = vmatpush1.msra.mxu0 0.0
    %658 = vmatprep.subr.mxu0 0.0
    %659 = vmatpush1.msra.mxu0 0.0
    %660 = vmatprep.subr.mxu0 0.0
    %661 = vmatpush1.msra.mxu0 0.0
    %662 = vmatprep.subr.mxu0 0.0
    %663 = vmatpush1.msra.mxu0 0.0
    %664 = vmatprep.subr.mxu0 0.0
    %665 = vmatpush1.msra.mxu0 0.0
    %666 = vmatprep.mubr.f32.mxu0 0.0
    %667 = vmatmul.mubr.f32.gmra.mrb[0].mxu0 %v600
    %v668 = vpop.f32.mrb[0].mxu0
    %v669 = vadd.f32 0.0, %v668
    %v670 = vpop.f32.mrb[0].mxu0
    %671 = vdwg.mxu0
    %v673 = vrot.slane %v669, 2
    %v675 = vadd.f32 %v136, %v673
    %v676 = vtanh.pop %v675
    %v678 = vrot.slane %v676, 6
    %680 = vmatprep.subr.mxu0 0.0
    %681 = vmatpush1.msra.mxu0 %v46
    %682 = vmatprep.subr.mxu0 0.0
    %683 = vmatpush1.msra.mxu0 %v47
    %684 = vmatprep.subr.mxu0 0.0
    %685 = vmatpush1.msra.mxu0 %v48
    %686 = vmatprep.subr.mxu0 0.0
    %687 = vmatpush1.msra.mxu0 %v49
    %688 = vmatprep.subr.mxu0 0.0
    %689 = vmatpush1.msra.mxu0 %v50
    %690 = vmatprep.subr.mxu0 0.0
    %691 = vmatpush1.msra.mxu0 %v51
    %692 = vmatprep.subr.mxu0 0.0
    %693 = vmatpush1.msra.mxu0 %v52
    %694 = vmatprep.subr.mxu0 0.0
    %695 = vmatpush1.msra.mxu0 %v53
    %696 = vmatprep.subr.mxu0 0.0
    %697 = vmatpush1.msra.mxu0 %v54
    %698 = vmatprep.subr.mxu0 0.0
    %699 = vmatpush1.msra.mxu0 %v55
    %700 = vmatprep.subr.mxu0 0.0
    %701 = vmatpush1.msra.mxu0 %v56
    %702 = vmatprep.subr.mxu0 0.0
    %703 = vmatpush1.msra.mxu0 %v57
    %704 = vmatprep.subr.mxu0 0.0
    %705 = vmatpush1.msra.mxu0 %v58
    %706 = vmatprep.subr.mxu0 0.0
    %707 = vmatpush1.msra.mxu0 %v59
    %708 = vmatprep.subr.mxu0 0.0
    %709 = vmatpush1.msra.mxu0 %v60
    %710 = vmatprep.subr.mxu0 0.0
    %711 = vmatpush1.msra.mxu0 %v61
    %712 = vmatprep.subr.mxu0 0.0
    %713 = vmatpush1.msra.mxu0 0.0
    %714 = vmatprep.subr.mxu0 0.0
    %715 = vmatpush1.msra.mxu0 0.0
    %716 = vmatprep.subr.mxu0 0.0
    %717 = vmatpush1.msra.mxu0 0.0
    %718 = vmatprep.subr.mxu0 0.0
    %719 = vmatpush1.msra.mxu0 0.0
    %720 = vmatprep.subr.mxu0 0.0
    %721 = vmatpush1.msra.mxu0 0.0
    %722 = vmatprep.subr.mxu0 0.0
    %723 = vmatpush1.msra.mxu0 0.0
    %724 = vmatprep.subr.mxu0 0.0
    %725 = vmatpush1.msra.mxu0 0.0
    %726 = vmatprep.subr.mxu0 0.0
    %727 = vmatpush1.msra.mxu0 0.0
    %728 = vmatprep.subr.mxu0 0.0
    %729 = vmatpush1.msra.mxu0 0.0
    %730 = vmatprep.subr.mxu0 0.0
    %731 = vmatpush1.msra.mxu0 0.0
    %732 = vmatprep.subr.mxu0 0.0
    %733 = vmatpush1.msra.mxu0 0.0
    %734 = vmatprep.subr.mxu0 0.0
    %735 = vmatpush1.msra.mxu0 0.0
    %736 = vmatprep.subr.mxu0 0.0
    %737 = vmatpush1.msra.mxu0 0.0
    %738 = vmatprep.subr.mxu0 0.0
    %739 = vmatpush1.msra.mxu0 0.0
    %740 = vmatprep.subr.mxu0 0.0
    %741 = vmatpush1.msra.mxu0 0.0
    %742 = vmatprep.subr.mxu0 0.0
    %743 = vmatpush1.msra.mxu0 0.0
    %744 = vmatprep.mubr.f32.mxu0 0.0
    %745 = vmatmul.mubr.f32.gmra.mrb[0].mxu0 %v678
    %v746 = vpop.f32.mrb[0].mxu0
    %v747 = vadd.f32 0.0, %v746
    %v748 = vpop.f32.mrb[0].mxu0
    %749 = vdwg.mxu0
    %v751 = vrot.slane %v747, 1
    %v753 = vadd.f32 %v136, %v751
    %v754 = vtanh.pop %v753
    %vm755 = vcmask 1040384
    %v756 = vsel %vm755, %v211, %v286
    %vm757 = vcmask 1041408
    %v758 = vsel %vm757, %v756, %v364
    %vm759 = vcmask 1042432
    %v760 = vsel %vm759, %v758, %v442
    %vm761 = vcmask 1043456
    %v762 = vsel %vm761, %v760, %v520
    %vm763 = vcmask 1044480
    %v764 = vsel %vm763, %v762, %v598
    %vm765 = vcmask 1045504
    %v766 = vsel %vm765, %v764, %v676
    %vm767 = vcmask 1046528
    %v768 = vsel %vm767, %v766, %v754
    %769 = vst [vmem:[#allocation2 - $0x7] sm:$0x80] %v754
    %v770 = vld [vmem:[%s5] sm:$0xff]
    %v771 = vld [vmem:[%s5 + $0x8] sm:$0xff]
    %v772 = vld [vmem:[%s5 + $0x10] sm:$0xff]
    %v773 = vld [vmem:[%s5 + $0x18] sm:$0xff]
    %v774 = vld [vmem:[%s5 + $0x20] sm:$0xff]
    %v775 = vld [vmem:[%s5 + $0x28] sm:$0xff]
    %v776 = vld [vmem:[%s5 + $0x30] sm:$0xff]
    %v777 = vld [vmem:[%s5 + $0x38] sm:$0xff]
    %v778 = vld [vmem:[%s5 + $0x40] sm:$0xff]
    %v779 = vld [vmem:[%s5 + $0x48] sm:$0xff]
    %v780 = vld [vmem:[%s5 + $0x50] sm:$0xff]
    %v781 = vld [vmem:[%s5 + $0x58] sm:$0xff]
    %v782 = vld [vmem:[%s5 + $0x60] sm:$0xff]
    %v783 = vld [vmem:[%s5 + $0x68] sm:$0xff]
    %v784 = vld [vmem:[%s5 + $0x70] sm:$0xff]
    %v785 = vld [vmem:[%s5 + $0x78] sm:$0xff]
    %v786 = vld [vmem:[%s6] sm:$0x1]
    %v788 = vlaneseq
    %v789 = vshrl.u32 %v788, 7
    %v790 = vsub.s32 0, %v789
    %v791 = vrot.slane %v786, %v790
    %793 = vmatprep.subr.mxu0 0.0
    %794 = vmatpush1.msra.mxu0 %v770
    %795 = vmatprep.subr.mxu0 0.0
    %796 = vmatpush1.msra.mxu0 %v771
    %797 = vmatprep.subr.mxu0 0.0
    %798 = vmatpush1.msra.mxu0 %v772
    %799 = vmatprep.subr.mxu0 0.0
    %800 = vmatpush1.msra.mxu0 %v773
    %801 = vmatprep.subr.mxu0 0.0
    %802 = vmatpush1.msra.mxu0 %v774
    %803 = vmatprep.subr.mxu0 0.0
    %804 = vmatpush1.msra.mxu0 %v775
    %805 = vmatprep.subr.mxu0 0.0
    %806 = vmatpush1.msra.mxu0 %v776
    %807 = vmatprep.subr.mxu0 0.0
    %808 = vmatpush1.msra.mxu0 %v777
    %809 = vmatprep.subr.mxu0 0.0
    %810 = vmatpush1.msra.mxu0 %v778
    %811 = vmatprep.subr.mxu0 0.0
    %812 = vmatpush1.msra.mxu0 %v779
    %813 = vmatprep.subr.mxu0 0.0
    %814 = vmatpush1.msra.mxu0 %v780
    %815 = vmatprep.subr.mxu0 0.0
    %816 = vmatpush1.msra.mxu0 %v781
    %817 = vmatprep.subr.mxu0 0.0
    %818 = vmatpush1.msra.mxu0 %v782
    %819 = vmatprep.subr.mxu0 0.0
    %820 = vmatpush1.msra.mxu0 %v783
    %821 = vmatprep.subr.mxu0 0.0
    %822 = vmatpush1.msra.mxu0 %v784
    %823 = vmatprep.subr.mxu0 0.0
    %824 = vmatpush1.msra.mxu0 %v785
    %825 = vmatprep.subr.mxu0 0.0
    %826 = vmatpush1.msra.mxu0 0.0
    %827 = vmatprep.subr.mxu0 0.0
    %828 = vmatpush1.msra.mxu0 0.0
    %829 = vmatprep.subr.mxu0 0.0
    %830 = vmatpush1.msra.mxu0 0.0
    %831 = vmatprep.subr.mxu0 0.0
    %832 = vmatpush1.msra.mxu0 0.0
    %833 = vmatprep.subr.mxu0 0.0
    %834 = vmatpush1.msra.mxu0 0.0
    %835 = vmatprep.subr.mxu0 0.0
    %836 = vmatpush1.msra.mxu0 0.0
    %837 = vmatprep.subr.mxu0 0.0
    %838 = vmatpush1.msra.mxu0 0.0
    %839 = vmatprep.subr.mxu0 0.0
    %840 = vmatpush1.msra.mxu0 0.0
    %841 = vmatprep.subr.mxu0 0.0
    %842 = vmatpush1.msra.mxu0 0.0
    %843 = vmatprep.subr.mxu0 0.0
    %844 = vmatpush1.msra.mxu0 0.0
    %845 = vmatprep.subr.mxu0 0.0
    %846 = vmatpush1.msra.mxu0 0.0
    %847 = vmatprep.subr.mxu0 0.0
    %848 = vmatpush1.msra.mxu0 0.0
    %849 = vmatprep.subr.mxu0 0.0
    %850 = vmatpush1.msra.mxu0 0.0
    %851 = vmatprep.subr.mxu0 0.0
    %852 = vmatpush1.msra.mxu0 0.0
    %853 = vmatprep.subr.mxu0 0.0
    %854 = vmatpush1.msra.mxu0 0.0
    %855 = vmatprep.subr.mxu0 0.0
    %856 = vmatpush1.msra.mxu0 0.0
    %857 = vmatprep.mubr.f32.mxu0 0.0
    %858 = vmatmul.mubr.f32.gmra.mrb[0].mxu0 %v768
    %v859 = vpop.f32.mrb[0].mxu0
    %v860 = vadd.f32 %v791, %v859
    %v861 = vpop.f32.mrb[0].mxu0
    %862 = vdwg.mxu0
    %v863 = vrot.slane %v860, 4
    %v864 = vmax.f32 %v860, %v863
    %v865 = vrot.slane %v864, 2
    %v866 = vmax.f32 %v864, %v865
    %v867 = vrot.slane %v866, 1
    %v868 = vmax.f32 %v866, %v867
    %v869 = vsub.f32 %v860, %v868
    %v870 = vmul.f32 %v869, 1.442695
    %v871 = vpow.pop %v870
    %v872 = vrot.slane %v871, 4
    %v873 = vadd.f32 %v871, %v872
    %v874 = vrot.slane %v873, 2
    %v875 = vadd.f32 %v873, %v874
    %v876 = vrot.slane %v875, 1
    %v877 = vadd.f32 %v875, %v876
    %v878 = vlog2.pop %v877
    %v879 = vmul.f32 %v878, 0.6931472
    %v880 = vsub.f32 %v869, %v879
    %881 = vst [vmem:[%s7] sm:$0xff] %v880
    // Predicated region
    $region30: #{rnn_forward.1} parent=1 // pred_check
      _
    $region31: #{rnn_forward.1} parent=1 // pred_check_branch
      %883 = sbr.rel (0) target = $region33
    $region32: #{rnn_forward.1} parent=1 // pred_region
      _
    $region33: #{rnn_forward.1} parent=1 // pred_fallthru
      _
    // Predicated region
    $region34: #{rnn_forward.1} parent=1 // pred_check
      _
    $region35: #{rnn_forward.1} parent=1 // pred_check_branch
      %885 = sbr.rel (0) target = $region37
    $region36: #{rnn_forward.1} parent=1 // pred_region
      %s887 = ssub.s32 16, 16
      %888 = vsyncadd [#allocation3], %s887
      %s890 = sshll.u32 [#allocation2], 4
      %s891 = int_to_ptr.vmem [resolvable:$true] %s890
      %893 = dma.vmem_to_hbm [thread:$0]  %s891, 16, %s8, [#allocation3]
    $region37: #{rnn_forward.1} parent=1 // pred_fallthru
      _
    // Predicated region
    $region38: #{rnn_forward.1} parent=1 // pred_check
      _
    $region39: #{rnn_forward.1} parent=1 // pred_check_branch
      %895 = sbr.rel (0) target = $region41
    $region40: #{rnn_forward.1} parent=1 // pred_region
      _
    $region41: #{rnn_forward.1} parent=1 // pred_fallthru
      _
    // Predicated region
    $region42: #{rnn_forward.1} parent=1 // pred_check
      _
    $region43: #{rnn_forward.1} parent=1 // pred_check_branch
      %897 = sbr.rel (0) target = $region45
    $region44: #{rnn_forward.1} parent=1 // pred_region
      %898 = dma.done [#allocation3], 16
    $region45: #{rnn_forward.1} parent=1 // pred_fallthru
      _
    %899 = vsyncpa [#allocation3], 1

</llo_original>
